<compile_context>
chip_gen: v7x
topology: tpu7x:2x2x1
jax: 0.10.0
libtpu: 0.0.40
codegen_flags: <defaults>
</compile_context>

<pallas_src>
import jax
import jax.numpy as jnp
from jax.experimental import pallas as pl
from jax.experimental.pallas import tpu as pltpu


NEG_SLOPE = 0.01  # torch.nn.functional.leaky_relu default


def _round_up(a, b):
    return (a + b - 1) // b * b


def _leaky_relu(v):
    return jnp.where(v >= 0, v, NEG_SLOPE * v)


# ---------------------------------------------------------------------------
# Kernels
# ---------------------------------------------------------------------------
def fc_kernel_single_k(x_ref, w_ref, o_ref):
    # Single reduction step: no scratch accumulator, fused LeakyReLU epilogue.
    acc = jnp.dot(x_ref[...], w_ref[...], preferred_element_type=jnp.float32)
    o_ref[...] = _leaky_relu(acc).astype(o_ref.dtype)


def fc_kernel_multi_k(x_ref, w_ref, o_ref, acc_ref):
    # x_ref: (tm, tk)  w_ref: (tk, tn)  o_ref: (tm, tn)  acc_ref: (tm, tn) f32
    k = pl.program_id(2)
    prod = jnp.dot(x_ref[...], w_ref[...], preferred_element_type=jnp.float32)

    @pl.when(k == 0)
    def _():
        acc_ref[...] = prod          # overwrite: saves the zero-init store + RMW

    @pl.when(k > 0)
    def _():
        acc_ref[...] += prod

    @pl.when(k == pl.num_programs(2) - 1)
    def _():
        o_ref[...] = _leaky_relu(acc_ref[...]).astype(o_ref.dtype)


# ---------------------------------------------------------------------------
# One-time weight preparation (hoisted out of the per-call path)
# ---------------------------------------------------------------------------
def prepare_fc_weight(weight, *, compute_dtype=jnp.bfloat16, tk_max=2048):
    """Prepare the PyTorch-layout (output_dim, input_dim) weight ONCE.

    Returns the weight transposed to (K, N) in `compute_dtype`, with K padded
    to a multiple of 128 only when K must be tiled (K > tk_max).
    """
    N, K = weight.shape
    w = jnp.asarray(weight).astype(compute_dtype).T  # (K, N): canonical MXU RHS
    if K > tk_max and K % 128 != 0:
        # Only the contraction axis ever needs zero padding for correctness.
        w = jnp.pad(w, ((0, _round_up(K, 128) - K), (0, 0)))
    return w


# ---------------------------------------------------------------------------
# Forward
# ---------------------------------------------------------------------------
def fc_forward(x, w_prepared, *, tm_max=512, tn_max=512, tk_max=2048,
               out_dtype=None, split_for_megacore=True):
    """leaky_relu(x @ W^T) with W pre-prepared by prepare_fc_weight.

    x:          (M, input_dim)
    w_prepared: (Kp, output_dim) with Kp >= input_dim (K zero-padded if needed).
    """
    M, K = x.shape
    Kp, N = w_prepared.shape
    assert Kp >= K, "prepared weight has fewer input features than x"
    out_dtype = out_dtype or x.dtype
    compute_dtype = w_prepared.dtype

    xc = x.astype(compute_dtype)                   # no-op when dtypes match
    if Kp != K:
        xc = jnp.pad(xc, ((0, 0), (0, Kp - K)))    # zeros contribute nothing

    # Fallback for an un-prepared large, non-128-multiple K (correctness first).
    if Kp > tk_max and Kp % 128 != 0:
        pad = _round_up(Kp, 128) - Kp
        xc = jnp.pad(xc, ((0, 0), (0, pad)))
        w_prepared = jnp.pad(w_prepared, ((0, pad), (0, 0)))
        Kp += pad

    # ---- tile selection (no M/N padding; full-extent blocks when they fit) --
    tm = M if M <= tm_max else tm_max              # tm_max is a multiple of 16
    tn = N if N <= tn_max else tn_max              # tn_max is a multiple of 128
    if Kp <= tk_max:
        tk = Kp                                    # single K step, exact cover
    else:
        tk = min(tk_max, Kp) // 128 * 128
        while Kp % tk:                             # largest 128-multiple dividing Kp
            tk -= 128

    grid_m = pl.cdiv(M, tm)
    grid_n = pl.cdiv(N, tn)
    grid_k = Kp // tk                              # exact by construction

    # v7x shards the "parallel" grid axes over 2 TensorCores; make sure a big
    # single-block (M, N) problem exposes at least 2 parallel blocks.
    if split_for_megacore and grid_m == 1 and grid_n == 1:
        if N >= 256 and N % 256 == 0:
            tn = N // 2
            grid_n = 2
        elif M >= 256 and M % 16 == 0:
            tm = M // 2
            grid_m = 2

    multi_k = grid_k > 1

    # ---- VMEM budget (generation aware) -------------------------------------
    bytes_c = jnp.dtype(compute_dtype).itemsize
    bytes_o = jnp.dtype(out_dtype).itemsize
    vmem_est = (2 * (tm * tk + tk * tn) * bytes_c       # double-buffered inputs
                + 2 * tm * tn * bytes_o                 # double-buffered output
                + (tm * tn * 4 if multi_k else 0))      # f32 accumulator
    try:
        cap = getattr(pltpu.get_tpu_info(), "vmem_capacity_bytes", 64 << 20)
    except Exception:
        cap = 64 << 20                                  # v7x per-TC floor
    vmem_limit = int(min(3 * cap // 4, max(16 << 20, 2 * vmem_est)))

    if multi_k:
        kernel = fc_kernel_multi_k
        grid = (grid_m, grid_n, grid_k)
        in_specs = [pl.BlockSpec((tm, tk), lambda i, j, k: (i, k)),
                    pl.BlockSpec((tk, tn), lambda i, j, k: (k, j))]
        out_specs = pl.BlockSpec((tm, tn), lambda i, j, k: (i, j))
        scratch_shapes = [pltpu.VMEM((tm, tn), jnp.float32)]
        dim_sem = ("parallel", "parallel", "arbitrary")
    else:
        kernel = fc_kernel_single_k
        grid = (grid_m, grid_n)
        in_specs = [pl.BlockSpec((tm, tk), lambda i, j: (i, 0)),
                    pl.BlockSpec((tk, tn), lambda i, j: (0, j))]
        out_specs = pl.BlockSpec((tm, tn), lambda i, j: (i, j))
        scratch_shapes = []
        dim_sem = ("parallel", "parallel")

    return pl.pallas_call(
        kernel,
        out_shape=jax.ShapeDtypeStruct((M, N), out_dtype),
        grid=grid,
        in_specs=in_specs,
        out_specs=out_specs,
        scratch_shapes=scratch_shapes,
        compiler_params=pltpu.CompilerParams(
            dimension_semantics=dim_sem,
            vmem_limit_bytes=vmem_limit,
        ),
    )(xc, w_prepared)


def leaky_relu_ref(v, slope=NEG_SLOPE):
    return jnp.where(v >= 0, v, slope * v)


if __name__ == "__main__":
    key = jax.random.PRNGKey(0)
    kx, kw, kx2, kw2 = jax.random.split(key, 4)

    # Dropout with p=0.0 (module default) is the identity in train and eval.
    # TODO(synk): training-mode dropout (p>0) would need pltpu.prng_* masking.
    # TODO(synk): batchnorm=True branch (BatchNorm1d) not implemented (default False).

    # --- Case 1: module-typical small FC (batch=16, input_dim=32, output_dim=128)
    batch, input_dim, output_dim = 16, 32, 128
    bound = 1.0 / (input_dim ** 0.5)   # nn.Linear default init, bias=False
    weight = jax.random.uniform(kw, (output_dim, input_dim), jnp.float32,
                                minval=-bound, maxval=bound)
    x = jax.random.normal(kx, (batch, input_dim), jnp.float32)
    y_ref = leaky_relu_ref(x @ weight.T)

    # One-time (hoisted) weight preparation for both paths.
    w_f32 = prepare_fc_weight(weight, compute_dtype=jnp.float32)
    w_bf16 = prepare_fc_weight(weight, compute_dtype=jnp.bfloat16)

    # Exact-semantics path (f32 MXU inputs).
    y_f32 = jax.block_until_ready(fc_forward(x, w_f32))
    assert jnp.allclose(y_f32, y_ref, atol=1e-5, rtol=1e-5), "f32 path mismatch"

    # Fast path (bf16 MXU inputs, f32 accumulation), jitted apply reusing the
    # prepared weight across calls.
    fc_apply_bf16 = jax.jit(lambda a: fc_forward(a, w_bf16))
    y_bf16 = jax.block_until_ready(fc_apply_bf16(x))
    assert jnp.allclose(y_bf16, y_ref, atol=2e-2, rtol=2e-2), "bf16 path mismatch"

    # --- Case 2: exercise the multi-K accumulator kernel (force tk_max=128).
    M2, K2, N2 = 16, 256, 128
    bound2 = 1.0 / (K2 ** 0.5)
    weight2 = jax.random.uniform(kw2, (N2, K2), jnp.float32,
                                 minval=-bound2, maxval=bound2)
    x2 = jax.random.normal(kx2, (M2, K2), jnp.float32)
    y2_ref = leaky_relu_ref(x2 @ weight2.T)
    w2_prep = prepare_fc_weight(weight2, compute_dtype=jnp.float32, tk_max=128)
    y2 = jax.block_until_ready(fc_forward(x2, w2_prep, tk_max=128))
    assert jnp.allclose(y2, y2_ref, atol=1e-5, rtol=1e-5), "multi-K path mismatch"

    print("KERNEL_OK")
</pallas_src>

<mosaic_0001>
module attributes {stable_mosaic.version = 11 : i64} {
  func.func @fc_kernel_single_k(%arg0: i32, %arg1: i32, %arg2: memref<16x32xf32, #tpu.memory_space<vmem>>, %arg3: memref<32x128xf32, #tpu.memory_space<vmem>>, %arg4: memref<16x128xf32, #tpu.memory_space<vmem>>) attributes {dimension_semantics = [#tpu.dimension_semantics<parallel>, #tpu.dimension_semantics<parallel>], iteration_bounds = array<i64: 1, 1>, scalar_prefetch = 0 : i64, scratch_operands = 0 : i64, tpu.core_type = #tpu.core_type<tc>, window_params = [{transform_indices = @transform_0, window_bounds = array<i64: 16, 32>}, {transform_indices = @transform_1, window_bounds = array<i64: 32, 128>}, {transform_indices = @transform_2, window_bounds = array<i64: 16, 128>}]} {
    %c0 = arith.constant 0 : index
    %c0_0 = arith.constant 0 : index
    %0 = vector.load %arg2[%c0, %c0_0] : memref<16x32xf32, #tpu.memory_space<vmem>>, vector<16x32xf32>
    %c0_1 = arith.constant 0 : index
    %c0_2 = arith.constant 0 : index
    %1 = vector.load %arg3[%c0_1, %c0_2] : memref<32x128xf32, #tpu.memory_space<vmem>>, vector<32x128xf32>
    %cst = arith.constant dense<0.000000e+00> : vector<16x128xf32>
    %2 = tpu.matmul %0, %1, %cst {dimension_numbers = #tpu.dot_dimension_numbers<[1], [0], [0], [1], [0, 0, 1, 1], [], []>} : vector<16x32xf32>, vector<32x128xf32>, vector<16x128xf32> -> vector<16x128xf32>
    %cst_3 = arith.constant 0.000000e+00 : f32
    %3 = vector.broadcast %cst_3 : f32 to vector<16x128xf32>
    %4 = arith.cmpf oge, %2, %3 : vector<16x128xf32>
    %cst_4 = arith.constant 0.00999999977 : f32
    %5 = vector.broadcast %cst_4 : f32 to vector<16x128xf32>
    %6 = arith.mulf %5, %2 : vector<16x128xf32>
    %7 = arith.select %4, %2, %6 : vector<16x128xi1>, vector<16x128xf32>
    %c0_5 = arith.constant 0 : index
    %c0_6 = arith.constant 0 : index
    %8 = vector.load %arg4[%c0_5, %c0_6] : memref<16x128xf32, #tpu.memory_space<vmem>>, vector<16x128xf32>
    tpu.vector_store %arg4[%c0_5, %c0_6], %7 {strides = array<i32>} : memref<16x128xf32, #tpu.memory_space<vmem>>, vector<16x128xf32>,
    return
  }
  func.func @transform_0(%arg0: i32, %arg1: i32) -> (i32, i32) {
    %c0_i32 = arith.constant 0 : i32
    %c0_i32_0 = arith.constant 0 : i32
    return %arg0, %c0_i32 : i32, i32
  }
  func.func @transform_1(%arg0: i32, %arg1: i32) -> (i32, i32) {
    %c0_i32 = arith.constant 0 : i32
    %c0_i32_0 = arith.constant 0 : i32
    return %c0_i32, %arg1 : i32, i32
  }
  func.func @transform_2(%arg0: i32, %arg1: i32) -> (i32, i32) {
    %c0_i32 = arith.constant 0 : i32
    return %arg0, %arg1 : i32, i32
  }
}

</mosaic_0001>

<llo_original>
// kernel: tpu_custom_call.1
$region0: #{tpu_custom_call.1}
  #allocation0 [shape = 'u32[]', space=smem, size = 0x4, offset = 0x4, fixed_abs, tag = 'smem constant byte address 0x4 - core index']
  #allocation1 [shape = 'u32[144,128]{1,0:T(1,128)}', space=vmem, size = 0x12000, scoped, tag = 'internal scratch']
  %s0 = inlined_call_operand.hbm [shape: f32[16,32], index: 0, kind: input, shape index: {}]
  %s1 = inlined_call_operand.hbm [shape: f32[32,128], index: 1, kind: input, shape index: {}]
  %s2 = inlined_call_operand.hbm [shape: f32[16,128], index: 2, kind: output, shape index: {}]
  %s3 = sld [smem:[#allocation0]]
  $region26: #{tpu_custom_call.1} parent=0
    _
  %s5 = ssub.s32 1, %s3
  %s6 = scalar_select 0, %s5, %s3
  $region1: #{tpu_custom_call.1} parent=0
    #allocation2 [shape = 'u8[8192]{0}', space=vmem, size = 0x2000, scoped, tag = 'input window, operand 0, single buffered']
    #allocation3 [shape = 's32[1]{0}', space=sflag, size = 0x4, scoped, tag = 'scoped memory for tpu_custom_call.1']
    #allocation4 [shape = 's32[1]{0}', space=sflag, size = 0x4, scoped, tag = 'scoped memory for tpu_custom_call.1']
    #allocation5 [shape = 'u8[16384]{0}', space=vmem, size = 0x4000, scoped, tag = 'input window, operand 1, single buffered']
    #allocation6 [shape = 's32[1]{0}', space=sflag, size = 0x4, scoped, tag = 'scoped memory for tpu_custom_call.1']
    #allocation7 [shape = 'u8[8192]{0}', space=vmem, size = 0x2000, scoped, tag = 'output window, operand 0, single buffered']
    %7 = vsyncpa [#allocation3], 0
    %8 = vsyncpa [#allocation6], 0
    %9 = vsyncpa [#allocation4], 0
    // Predicated region
    $region2: #{tpu_custom_call.1} parent=1 // pred_check
      _
    $region3: #{tpu_custom_call.1} parent=1 // pred_check_branch
      %11 = sbr.rel (0) target = $region5
    $region4: #{tpu_custom_call.1} parent=1 // pred_region
      %s13 = ssub.s32 256, 256
      %14 = vsyncadd [#allocation3], %s13
      %s15 = sshll.u32 [#allocation2], 4
      %s16 = int_to_ptr.vmem [resolvable:$true] %s15
      %21 = dma.hbm_to_vmem [thread:$0]  %s0, 256, %s16, [#allocation3], 128, 128, 8
    $region5: #{tpu_custom_call.1} parent=1 // pred_fallthru
      _
    // Predicated region
    $region6: #{tpu_custom_call.1} parent=1 // pred_check
      _
    $region7: #{tpu_custom_call.1} parent=1 // pred_check_branch
      %23 = sbr.rel (0) target = $region9
    $region8: #{tpu_custom_call.1} parent=1 // pred_region
      %s25 = ssub.s32 512, 512
      %26 = vsyncadd [#allocation6], %s25
      %s27 = sshll.u32 [#allocation5], 4
      %s28 = int_to_ptr.vmem [resolvable:$true] %s27
      %33 = dma.hbm_to_vmem [thread:$0]  %s1, 512, %s28, [#allocation6], 128, 128, 8
    $region9: #{tpu_custom_call.1} parent=1 // pred_fallthru
      _
    // Predicated region
    $region10: #{tpu_custom_call.1} parent=1 // pred_check
      _
    $region11: #{tpu_custom_call.1} parent=1 // pred_check_branch
      %35 = sbr.rel (0) target = $region13
    $region12: #{tpu_custom_call.1} parent=1 // pred_region
      %36 = dma.done [#allocation3], 256
    $region13: #{tpu_custom_call.1} parent=1 // pred_fallthru
      _
    // Predicated region
    $region14: #{tpu_custom_call.1} parent=1 // pred_check
      _
    $region15: #{tpu_custom_call.1} parent=1 // pred_check_branch
      %38 = sbr.rel (0) target = $region17
    $region16: #{tpu_custom_call.1} parent=1 // pred_region
      %39 = dma.done [#allocation6], 512
    $region17: #{tpu_custom_call.1} parent=1 // pred_fallthru
      _
    %v40 = vld [vmem:[#allocation2] sm:$0xff]
    %v41 = vld [vmem:[#allocation2 + $0x8] sm:$0xff]
    %v42 = vld [vmem:[#allocation5] sm:$0xff]
    %v43 = vld [vmem:[#allocation5 + $0x8] sm:$0xff]
    %v44 = vld [vmem:[#allocation5 + $0x10] sm:$0xff]
    %v45 = vld [vmem:[#allocation5 + $0x18] sm:$0xff]
    %vm46 = vcmask 261120
    %v48 = vsel %vm46, %v40, 0
    %v51 = vsel %vm46, %v41, 0
    %53 = vmatprep.subr.mxu0 0.0
    %54 = vmatpush1.msra.mxu0 %v42
    %55 = vmatprep.subr.mxu0 0.0
    %56 = vmatpush1.msra.mxu0 %v43
    %57 = vmatprep.subr.mxu0 0.0
    %58 = vmatpush1.msra.mxu0 %v44
    %59 = vmatprep.subr.mxu0 0.0
    %60 = vmatpush1.msra.mxu0 %v45
    %61 = vmatprep.subr.mxu0 0.0
    %62 = vmatpush1.msra.mxu0 0.0
    %63 = vmatprep.subr.mxu0 0.0
    %64 = vmatpush1.msra.mxu0 0.0
    %65 = vmatprep.subr.mxu0 0.0
    %66 = vmatpush1.msra.mxu0 0.0
    %67 = vmatprep.subr.mxu0 0.0
    %68 = vmatpush1.msra.mxu0 0.0
    %69 = vmatprep.subr.mxu0 0.0
    %70 = vmatpush1.msra.mxu0 0.0
    %71 = vmatprep.subr.mxu0 0.0
    %72 = vmatpush1.msra.mxu0 0.0
    %73 = vmatprep.subr.mxu0 0.0
    %74 = vmatpush1.msra.mxu0 0.0
    %75 = vmatprep.subr.mxu0 0.0
    %76 = vmatpush1.msra.mxu0 0.0
    %77 = vmatprep.subr.mxu0 0.0
    %78 = vmatpush1.msra.mxu0 0.0
    %79 = vmatprep.subr.mxu0 0.0
    %80 = vmatpush1.msra.mxu0 0.0
    %81 = vmatprep.subr.mxu0 0.0
    %82 = vmatpush1.msra.mxu0 0.0
    %83 = vmatprep.subr.mxu0 0.0
    %84 = vmatpush1.msra.mxu0 0.0
    %85 = vmatprep.subr.mxu0 0.0
    %86 = vmatpush1.msra.mxu0 0.0
    %87 = vmatprep.subr.mxu0 0.0
    %88 = vmatpush1.msra.mxu0 0.0
    %89 = vmatprep.subr.mxu0 0.0
    %90 = vmatpush1.msra.mxu0 0.0
    %91 = vmatprep.subr.mxu0 0.0
    %92 = vmatpush1.msra.mxu0 0.0
    %93 = vmatprep.subr.mxu0 0.0
    %94 = vmatpush1.msra.mxu0 0.0
    %95 = vmatprep.subr.mxu0 0.0
    %96 = vmatpush1.msra.mxu0 0.0
    %97 = vmatprep.subr.mxu0 0.0
    %98 = vmatpush1.msra.mxu0 0.0
    %99 = vmatprep.subr.mxu0 0.0
    %100 = vmatpush1.msra.mxu0 0.0
    %101 = vmatprep.subr.mxu0 0.0
    %102 = vmatpush1.msra.mxu0 0.0
    %103 = vmatprep.subr.mxu0 0.0
    %104 = vmatpush1.msra.mxu0 0.0
    %105 = vmatprep.subr.mxu0 0.0
    %106 = vmatpush1.msra.mxu0 0.0
    %107 = vmatprep.subr.mxu0 0.0
    %108 = vmatpush1.msra.mxu0 0.0
    %109 = vmatprep.subr.mxu0 0.0
    %110 = vmatpush1.msra.mxu0 0.0
    %111 = vmatprep.subr.mxu0 0.0
    %112 = vmatpush1.msra.mxu0 0.0
    %113 = vmatprep.subr.mxu0 0.0
    %114 = vmatpush1.msra.mxu0 0.0
    %115 = vmatprep.subr.mxu0 0.0
    %116 = vmatpush1.msra.mxu0 0.0
    %117 = vmatprep.mubr.f32.mxu0 0.0
    %118 = vmatmul.mubr.f32.gmra.mrb[0].mxu0 %v48
    %v119 = vpop.f32.mrb[0].mxu0
    %v120 = vadd.f32 0.0, %v119
    %v121 = vpop.f32.mrb[0].mxu0
    %122 = vmatprep.mubr.f32.mxu0 0.0
    %123 = vmatmul.mubr.f32.gmra.mrb[0].mxu0 %v51
    %v124 = vpop.f32.mrb[0].mxu0
    %v125 = vadd.f32 0.0, %v124
    %v126 = vpop.f32.mrb[0].mxu0
    %127 = vdwg.mxu0
    %vm128 = vcmp.ge.f32.partialorder %v120, 0.0
    %vm129 = vcmp.ge.f32.partialorder %v125, 0.0
    %v130 = vmul.f32 %v120, 0.01
    %v131 = vmul.f32 %v125, 0.01
    %v132 = vsel %vm128, %v120, %v130
    %v133 = vsel %vm129, %v125, %v131
    %134 = vst [vmem:[#allocation7] sm:$0xff] %v132
    %135 = vst [vmem:[#allocation7 + $0x8] sm:$0xff] %v133
    // Predicated region
    $region18: #{tpu_custom_call.1} parent=1 // pred_check
      _
    $region19: #{tpu_custom_call.1} parent=1 // pred_check_branch
      %137 = sbr.rel (0) target = $region21
    $region20: #{tpu_custom_call.1} parent=1 // pred_region
      %s139 = ssub.s32 256, 256
      %140 = vsyncadd [#allocation4], %s139
      %s141 = sshll.u32 [#allocation7], 4
      %s142 = int_to_ptr.vmem [resolvable:$true] %s141
      %147 = dma.vmem_to_hbm [thread:$0]  %s142, 256, %s2, [#allocation4], 128, 128, 8
    $region21: #{tpu_custom_call.1} parent=1 // pred_fallthru
      _
    // Predicated region
    $region22: #{tpu_custom_call.1} parent=1 // pred_check
      _
    $region23: #{tpu_custom_call.1} parent=1 // pred_check_branch
      %149 = sbr.rel (0) target = $region25
    $region24: #{tpu_custom_call.1} parent=1 // pred_region
      %150 = dma.done [#allocation4], 256
    $region25: #{tpu_custom_call.1} parent=1 // pred_fallthru
      _
    %151 = vsyncpa [#allocation3], 1
    %152 = vsyncpa [#allocation6], 1
    %153 = vsyncpa [#allocation4], 1

</llo_original>
